<compile_context>
chip_gen: v6e
topology: v6e:2x2x1
jax: 0.10.0
libtpu: 0.0.40
codegen_flags: <defaults>
</compile_context>

<pallas_src>
import functools

import jax
import jax.numpy as jnp
from jax.experimental import pallas as pl
from jax.experimental.pallas import tpu as pltpu


def _channel_attention_kernel(x_ref, w1t_ref, w2t_ref, o_ref, acc_ref, *,
                              inv_hw, tail_valid):
    # x_ref  : (B_T, C, HW_T)  spatial slab for a block of batch rows
    # w1t_ref: (C, Cr)         fc1 weight, pre-transposed in the wrapper
    # w2t_ref: (Cr, C)         fc2 weight, pre-transposed in the wrapper
    # o_ref  : (B_T, C)        sigmoid(fc2(relu(fc1(avg_pool(x)))))
    # acc_ref: (B_T, C) f32    running spatial sum (VMEM scratch)
    # tail_valid: None if spatial tiles cover HW exactly, else the number of
    #             valid lanes in the last spatial tile (static int).
    h = pl.program_id(1)
    n_h = pl.num_programs(1)

    @pl.when(h == 0)
    def _init():
        acc_ref[...] = jnp.zeros_like(acc_ref)

    if tail_valid is None:
        # Exact tiling: plain partial sum with f32 accumulation.
        acc_ref[...] += jnp.sum(x_ref[...], axis=-1, dtype=jnp.float32)
    else:
        @pl.when(h < n_h - 1)
        def _full_tile():
            acc_ref[...] += jnp.sum(x_ref[...], axis=-1, dtype=jnp.float32)

        @pl.when(h == n_h - 1)
        def _tail_tile():
            # Lanes past the true HW extent hold unspecified data (partial edge
            # block, no OOB guard) -> mask before summing (zeros are exact).
            lane = jax.lax.broadcasted_iota(jnp.int32, x_ref.shape, 2)
            xm = jnp.where(lane < tail_valid, x_ref[...], 0)
            acc_ref[...] += jnp.sum(xm, axis=-1, dtype=jnp.float32)

    @pl.when(h == n_h - 1)
    def _finalize():
        avg = acc_ref[...] * inv_hw                                      # (B_T, C)
        hid = jnp.dot(avg, w1t_ref[...], preferred_element_type=jnp.float32)
        hid = jnp.maximum(hid, 0.0)                                      # (B_T, Cr)
        out = jnp.dot(hid, w2t_ref[...], preferred_element_type=jnp.float32)
        # Numerically-stable sigmoid from ops with guaranteed Mosaic lowering.
        e = jnp.exp(-jnp.abs(out))
        sig = jnp.where(out >= 0.0, 1.0 / (1.0 + e), e / (1.0 + e))
        o_ref[...] = sig.astype(o_ref.dtype)
        # NOTE: the PyTorch forward also computes a max_pool branch, but its
        # result never reaches the returned value (dead code) -> omitted.


def _choose_tiles(B, C, HW, x_itemsize, out_itemsize, max_block_bytes):
    """Pick (b_t, hw_t): keep the spatial tile large/contiguous and shrink the
    batch tile first; align b_t to the output dtype's sublane packing."""
    sub = max(8, 32 // out_itemsize)          # 8 f32 / 16 bf16 / 32 int8-fp8

    if B <= sub:
        b_cap = b_min = B                     # full batch extent: always legal
    else:
        b_min = sub
        b_cap = (B // sub) * sub
        if B >= 2 * sub:                      # v7x: >=2 tiles on the parallel axis
            half = -(-B // 2)
            b_cap = min(b_cap, -(-half // sub) * sub)

    row_bytes = C * HW * x_itemsize           # one batch row, full spatial extent

    # Prefer a full spatial row per block (one contiguous DMA run per (b, c) row,
    # no tail masking); shrink the batch tile to fit the block budget.
    if b_min * row_bytes <= max_block_bytes:
        b_fit = (max_block_bytes // row_bytes) // sub * sub
        b_t = max(b_min, min(b_cap, b_fit))
        return b_t, HW

    # Otherwise tile the spatial axis in 128-lane multiples, kept large so DMA
    # rows stay multi-KiB contiguous; the in-kernel mask handles the HW tail.
    hw_cap = -(-HW // 128) * 128
    hw_floor = min(1024 if x_itemsize < 4 else 512, hw_cap)
    hw_t = (max_block_bytes // (b_min * C * x_itemsize)) // 128 * 128
    hw_t = max(hw_floor, min(hw_t, hw_cap))
    return b_min, hw_t


def channel_attention(x_nchw, w1, w2, *, max_block_bytes=4 << 20):
    """x_nchw: (B, C, H, W); w1: (Cr, C); w2: (C, Cr). Returns (B, C, 1, 1)."""
    B, C, H, W = x_nchw.shape
    Cr = w1.shape[0]
    HW = H * W
    x_itemsize = jnp.dtype(x_nchw.dtype).itemsize
    out_dtype = x_nchw.dtype
    out_itemsize = jnp.dtype(out_dtype).itemsize

    x = x_nchw.reshape(B, C, HW)              # metadata-only collapse (no HBM copy)

    b_t, hw_t = _choose_tiles(B, C, HW, x_itemsize, out_itemsize, max_block_bytes)
    n_b = pl.cdiv(B, b_t)
    n_h = pl.cdiv(HW, hw_t)
    tail = HW - (n_h - 1) * hw_t
    tail_valid = None if tail == hw_t else tail
    grid = (n_b, n_h)

    # Pre-transpose the 1x1-conv weights in the wrapper (no in-kernel .T / XLU).
    w1t = jnp.asarray(w1).T                   # (C, Cr)
    w2t = jnp.asarray(w2).T                   # (Cr, C)

    kernel = functools.partial(
        _channel_attention_kernel, inv_hw=1.0 / float(HW), tail_valid=tail_valid)

    # x input spec; request 3-deep buffering when there are >=3 spatial tiles to
    # hide the per-batch-tile epilogue bubble (guarded for older Pallas versions).
    x_index = lambda b, h: (b, 0, h)
    x_spec = pl.BlockSpec((b_t, C, hw_t), x_index)
    n_bufs = 2
    if n_h >= 3 and hasattr(pl, "Buffered"):
        try:
            x_spec = pl.BlockSpec((b_t, C, hw_t), x_index,
                                  pipeline_mode=pl.Buffered(3))
            n_bufs = 3
        except TypeError:
            pass

    block_bytes = b_t * C * hw_t * x_itemsize
    vmem_limit = int(min(64 << 20,
                         max(32 << 20, (n_bufs + 1) * block_bytes + (2 << 20))))

    cost = pl.CostEstimate(
        flops=int(B * C * HW + 4 * B * C * Cr),
        transcendentals=int(B * C),
        bytes_accessed=int(
            x.size * x_itemsize
            + w1t.size * jnp.dtype(w1t.dtype).itemsize
            + w2t.size * jnp.dtype(w2t.dtype).itemsize
            + B * C * out_itemsize
        ),
    )

    out = pl.pallas_call(
        kernel,
        out_shape=jax.ShapeDtypeStruct((B, C), out_dtype),
        grid=grid,
        in_specs=[
            x_spec,
            pl.BlockSpec((C, Cr), lambda b, h: (0, 0)),  # constant index -> resident
            pl.BlockSpec((Cr, C), lambda b, h: (0, 0)),
        ],
        out_specs=pl.BlockSpec((b_t, C), lambda b, h: (b, 0)),
        scratch_shapes=[pltpu.VMEM((b_t, C), jnp.float32)],
        compiler_params=pltpu.CompilerParams(
            dimension_semantics=("parallel", "arbitrary"),
            vmem_limit_bytes=vmem_limit,
        ),
        cost_estimate=cost,
    )(x, w1t, w2t)

    return out.reshape(B, C, 1, 1)


def _reference(x, w1, w2):
    avg = jnp.mean(x, axis=(2, 3))
    return jax.nn.sigmoid(jnp.maximum(avg @ w1.T, 0.0) @ w2.T).reshape(
        x.shape[0], x.shape[1], 1, 1)


if __name__ == "__main__":
    key = jax.random.PRNGKey(0)

    # Case 1: shapes matching the module spec (B=2, C=4, 16x16, ratio=1).
    B, C, H, W = 2, 4, 16, 16
    ratio = 1
    Cr = C // ratio
    kx, k1, k2 = jax.random.split(key, 3)
    x = jax.random.normal(kx, (B, C, H, W), dtype=jnp.float32)
    # Conv2d(C, Cr, 1, bias=False) weight -> (Cr, C); Conv2d(Cr, C, 1, bias=False) -> (C, Cr)
    w1 = jax.random.normal(k1, (Cr, C), dtype=jnp.float32) * 0.1
    w2 = jax.random.normal(k2, (C, Cr), dtype=jnp.float32) * 0.1

    y = channel_attention(x, w1, w2)
    jax.block_until_ready(y)
    assert jnp.allclose(y, _reference(x, w1, w2), atol=1e-5), "case-1 mismatch"

    # Case 2: exercise multi-tile batch axis, spatial tiling with in-kernel tail
    # masking (HW=1600 not a multiple of hw_t) by forcing a small block budget.
    B2, C2, H2, W2 = 32, 8, 40, 40
    kx2, k12, k22 = jax.random.split(jax.random.PRNGKey(0), 3)
    x2 = jax.random.normal(kx2, (B2, C2, H2, W2), dtype=jnp.float32)
    w12 = jax.random.normal(k12, (C2, C2), dtype=jnp.float32) * 0.1
    w22 = jax.random.normal(k22, (C2, C2), dtype=jnp.float32) * 0.1
    y2 = channel_attention(x2, w12, w22, max_block_bytes=140 * 1024)
    jax.block_until_ready(y2)
    assert jnp.allclose(y2, _reference(x2, w12, w22), atol=1e-5), "case-2 mismatch"

    print("KERNEL_OK")
</pallas_src>

<mosaic_0001>
module attributes {stable_mosaic.version = 11 : i64} {
  func.func @_channel_attention_kernel(%arg0: i32, %arg1: i32, %arg2: memref<2x4x256xf32, #tpu.memory_space<vmem>>, %arg3: memref<4x4xf32, #tpu.memory_space<vmem>>, %arg4: memref<4x4xf32, #tpu.memory_space<vmem>>, %arg5: memref<2x4xf32, #tpu.memory_space<vmem>>, %arg6: memref<2x4xf32, #tpu.memory_space<vmem>>) attributes {dimension_semantics = [#tpu.dimension_semantics<parallel>, #tpu.dimension_semantics<arbitrary>], iteration_bounds = array<i64: 1, 1>, scalar_prefetch = 0 : i64, scratch_operands = 1 : i64, tpu.core_type = #tpu.core_type<tc>, window_params = [{transform_indices = @transform_0, window_bounds = array<i64: 2, 4, 256>}, {pipeline_mode = #tpu.pipeline_mode<synchronous>, transform_indices = @transform_1, window_bounds = array<i64: 4, 4>}, {pipeline_mode = #tpu.pipeline_mode<synchronous>, transform_indices = @transform_2, window_bounds = array<i64: 4, 4>}, {transform_indices = @transform_3, window_bounds = array<i64: 2, 4>}]} {
    %c0_i32 = arith.constant 0 : i32
    %0 = arith.cmpi eq, %arg1, %c0_i32 : i32
    %1 = arith.extui %0 : i1 to i32
    %c0_i32_0 = arith.constant 0 : i32
    %2 = arith.cmpi ne, %1, %c0_i32_0 : i32
    scf.if %2 {
      %cst_9 = arith.constant 0.000000e+00 : f32
      %11 = vector.broadcast %cst_9 : f32 to vector<2x4xf32>
      %c0_10 = arith.constant 0 : index
      %c0_11 = arith.constant 0 : index
      %12 = vector.load %arg6[%c0_10, %c0_11] : memref<2x4xf32, #tpu.memory_space<vmem>>, vector<2x4xf32>
      tpu.vector_store %arg6[%c0_10, %c0_11], %11 {strides = array<i32>} : memref<2x4xf32, #tpu.memory_space<vmem>>, vector<2x4xf32>,
    } else {
    }
    %c0 = arith.constant 0 : index
    %c0_1 = arith.constant 0 : index
    %3 = vector.load %arg6[%c0, %c0_1] : memref<2x4xf32, #tpu.memory_space<vmem>>, vector<2x4xf32>
    %c0_2 = arith.constant 0 : index
    %c0_3 = arith.constant 0 : index
    %c0_4 = arith.constant 0 : index
    %4 = vector.load %arg2[%c0_2, %c0_3, %c0_4] : memref<2x4x256xf32, #tpu.memory_space<vmem>>, vector<2x4x256xf32>
    %cst = arith.constant dense<0.000000e+00> : vector<2x4xf32>
    %5 = vector.multi_reduction <add>, %4, %cst [2] : vector<2x4x256xf32> to vector<2x4xf32>
    %6 = arith.addf %3, %5 : vector<2x4xf32>
    %c0_5 = arith.constant 0 : index
    %c0_6 = arith.constant 0 : index
    %7 = vector.load %arg6[%c0_5, %c0_6] : memref<2x4xf32, #tpu.memory_space<vmem>>, vector<2x4xf32>
    tpu.vector_store %arg6[%c0_5, %c0_6], %6 {strides = array<i32>} : memref<2x4xf32, #tpu.memory_space<vmem>>, vector<2x4xf32>,
    %c0_i32_7 = arith.constant 0 : i32
    %8 = arith.cmpi eq, %arg1, %c0_i32_7 : i32
    %9 = arith.extui %8 : i1 to i32
    %c0_i32_8 = arith.constant 0 : i32
    %10 = arith.cmpi ne, %9, %c0_i32_8 : i32
    scf.if %10 {
      %c0_9 = arith.constant 0 : index
      %c0_10 = arith.constant 0 : index
      %11 = vector.load %arg6[%c0_9, %c0_10] : memref<2x4xf32, #tpu.memory_space<vmem>>, vector<2x4xf32>
      %cst_11 = arith.constant 3.906250e-03 : f32
      %12 = vector.broadcast %cst_11 : f32 to vector<2x4xf32>
      %13 = arith.mulf %11, %12 : vector<2x4xf32>
      %c0_12 = arith.constant 0 : index
      %c0_13 = arith.constant 0 : index
      %14 = vector.load %arg3[%c0_12, %c0_13] : memref<4x4xf32, #tpu.memory_space<vmem>>, vector<4x4xf32>
      %cst_14 = arith.constant dense<0.000000e+00> : vector<2x4xf32>
      %15 = tpu.matmul %13, %14, %cst_14 {dimension_numbers = #tpu.dot_dimension_numbers<[1], [0], [0], [1], [0, 0, 1, 1], [], []>} : vector<2x4xf32>, vector<4x4xf32>, vector<2x4xf32> -> vector<2x4xf32>
      %cst_15 = arith.constant 0.000000e+00 : f32
      %16 = vector.broadcast %cst_15 : f32 to vector<2x4xf32>
      %17 = arith.maximumf %15, %16 : vector<2x4xf32>
      %c0_16 = arith.constant 0 : index
      %c0_17 = arith.constant 0 : index
      %18 = vector.load %arg4[%c0_16, %c0_17] : memref<4x4xf32, #tpu.memory_space<vmem>>, vector<4x4xf32>
      %cst_18 = arith.constant dense<0.000000e+00> : vector<2x4xf32>
      %19 = tpu.matmul %17, %18, %cst_18 {dimension_numbers = #tpu.dot_dimension_numbers<[1], [0], [0], [1], [0, 0, 1, 1], [], []>} : vector<2x4xf32>, vector<4x4xf32>, vector<2x4xf32> -> vector<2x4xf32>
      %20 = math.absf %19 : vector<2x4xf32>
      %cst_19 = arith.constant 0.000000e+00 : f32
      %21 = vector.broadcast %cst_19 : f32 to vector<2x4xf32>
      %22 = arith.subf %21, %20 : vector<2x4xf32>
      %23 = math.exp %22 : vector<2x4xf32>
      %cst_20 = arith.constant 0.000000e+00 : f32
      %24 = vector.broadcast %cst_20 : f32 to vector<2x4xf32>
      %25 = arith.cmpf oge, %19, %24 : vector<2x4xf32>
      %cst_21 = arith.constant 1.000000e+00 : f32
      %26 = vector.broadcast %cst_21 : f32 to vector<2x4xf32>
      %27 = arith.addf %26, %23 : vector<2x4xf32>
      %cst_22 = arith.constant 1.000000e+00 : f32
      %28 = vector.broadcast %cst_22 : f32 to vector<2x4xf32>
      %29 = arith.divf %28, %27 : vector<2x4xf32>
      %cst_23 = arith.constant 1.000000e+00 : f32
      %30 = vector.broadcast %cst_23 : f32 to vector<2x4xf32>
      %31 = arith.addf %30, %23 : vector<2x4xf32>
      %32 = arith.divf %23, %31 : vector<2x4xf32>
      %33 = arith.select %25, %29, %32 : vector<2x4xi1>, vector<2x4xf32>
      %c0_24 = arith.constant 0 : index
      %c0_25 = arith.constant 0 : index
      %34 = vector.load %arg5[%c0_24, %c0_25] : memref<2x4xf32, #tpu.memory_space<vmem>>, vector<2x4xf32>
      tpu.vector_store %arg5[%c0_24, %c0_25], %33 {strides = array<i32>} : memref<2x4xf32, #tpu.memory_space<vmem>>, vector<2x4xf32>,
    } else {
    }
    return
  }
  func.func @transform_0(%arg0: i32, %arg1: i32) -> (i32, i32, i32) {
    %c0_i32 = arith.constant 0 : i32
    %c0_i32_0 = arith.constant 0 : i32
    return %arg0, %c0_i32, %arg1 : i32, i32, i32
  }
  func.func @transform_1(%arg0: i32, %arg1: i32) -> (i32, i32) {
    %c0_i32 = arith.constant 0 : i32
    %c0_i32_0 = arith.constant 0 : i32
    %c0_i32_1 = arith.constant 0 : i32
    return %c0_i32, %c0_i32_0 : i32, i32
  }
  func.func @transform_2(%arg0: i32, %arg1: i32) -> (i32, i32) {
    %c0_i32 = arith.constant 0 : i32
    %c0_i32_0 = arith.constant 0 : i32
    %c0_i32_1 = arith.constant 0 : i32
    return %c0_i32, %c0_i32_0 : i32, i32
  }
  func.func @transform_3(%arg0: i32, %arg1: i32) -> (i32, i32) {
    %c0_i32 = arith.constant 0 : i32
    %c0_i32_0 = arith.constant 0 : i32
    return %arg0, %c0_i32 : i32, i32
  }
}

</mosaic_0001>

<llo_original>
// kernel: tpu_custom_call.1
$region0: #{tpu_custom_call.1}
  #allocation0 [shape = 'u32[]', space=smem, size = 0x4, offset = 0x4, fixed_abs, tag = 'smem constant byte address 0x4 - core index']
  #allocation1 [shape = 'u32[144,128]{1,0:T(1,128)}', space=vmem, size = 0x12000, scoped, tag = 'internal scratch']
  #allocation2 [shape = 'f32[2,4]{1,0:T(2,128)}', space=vmem, size = 0x400, scoped, tag = 'scratch operand']
  %s0 = inlined_call_operand.hbm [shape: f32[2,4,256], index: 0, kind: input, shape index: {}]
  %s1 = inlined_call_operand.hbm [shape: f32[4,4], index: 1, kind: input, shape index: {}]
  %s2 = inlined_call_operand.hbm [shape: f32[4,4], index: 2, kind: input, shape index: {}]
  %s3 = inlined_call_operand.hbm [shape: f32[2,4], index: 3, kind: output, shape index: {}]
  %s4 = sld [smem:[#allocation0]]
  $region42: #{tpu_custom_call.1} parent=0
    _
  %s6 = ssub.s32 1, %s4
  %s7 = scalar_select 0, %s6, %s4
  $region1: #{tpu_custom_call.1} parent=0
    #allocation3 [shape = 'u8[8192]{0}', space=vmem, size = 0x2000, scoped, tag = 'input window, operand 0, single buffered']
    #allocation4 [shape = 's32[1]{0}', space=sflag, size = 0x4, scoped, tag = 'scoped memory for tpu_custom_call.1']
    #allocation5 [shape = 's32[1]{0}', space=sflag, size = 0x4, scoped, tag = 'scoped memory for tpu_custom_call.1']
    #allocation6 [shape = 'u8[2048]{0}', space=vmem, size = 0x800, scoped, tag = 'input window, operand 1, single buffered']
    #allocation7 [shape = 's32[1]{0}', space=sflag, size = 0x4, scoped, tag = 'scoped memory for tpu_custom_call.1']
    #allocation8 [shape = 'u8[2048]{0}', space=vmem, size = 0x800, scoped, tag = 'input window, operand 2, single buffered']
    #allocation9 [shape = 'u8[1024]{0}', space=vmem, size = 0x400, scoped, tag = 'output window, operand 0, single buffered']
    %8 = vsyncpa [#allocation4], 0
    %9 = vsyncpa [#allocation7], 0
    %10 = vsyncpa [#allocation5], 0
    // Predicated region
    $region2: #{tpu_custom_call.1} parent=1 // pred_check
      _
    $region3: #{tpu_custom_call.1} parent=1 // pred_check_branch
      %12 = sbr.rel (0) target = $region5
    $region4: #{tpu_custom_call.1} parent=1 // pred_region
      %s14 = ssub.s32 256, 256
      %15 = vsyncadd [#allocation4], %s14
      %s16 = sshll.u32 [#allocation3], 4
      %s17 = int_to_ptr.vmem [resolvable:$true] %s16
      %22 = dma.hbm_to_vmem [thread:$0]  %s0, 256, %s17, [#allocation4], 128, 128, 8
    $region5: #{tpu_custom_call.1} parent=1 // pred_fallthru
      _
    // Predicated region
    $region6: #{tpu_custom_call.1} parent=1 // pred_check
      _
    $region7: #{tpu_custom_call.1} parent=1 // pred_check_branch
      %24 = sbr.rel (0) target = $region9
    $region8: #{tpu_custom_call.1} parent=1 // pred_region
      %s26 = ssub.s32 64, 64
      %27 = vsyncadd [#allocation7], %s26
      %s29 = sshll.u32 [#allocation6], 4
      %s30 = int_to_ptr.vmem [resolvable:$true] %s29
      %32 = dma.hbm_to_vmem [thread:$0]  %s1, 64, %s30, [#allocation7]
    $region9: #{tpu_custom_call.1} parent=1 // pred_fallthru
      _
    // Predicated region
    $region10: #{tpu_custom_call.1} parent=1 // pred_check
      _
    $region11: #{tpu_custom_call.1} parent=1 // pred_check_branch
      %34 = sbr.rel (0) target = $region13
    $region12: #{tpu_custom_call.1} parent=1 // pred_region
      %s36 = ssub.s32 64, 64
      %37 = vsyncadd [#allocation7], %s36
      %s39 = sshll.u32 [#allocation8], 4
      %s40 = int_to_ptr.vmem [resolvable:$true] %s39
      %42 = dma.hbm_to_vmem [thread:$0]  %s2, 64, %s40, [#allocation7]
    $region13: #{tpu_custom_call.1} parent=1 // pred_fallthru
      _
    // Predicated region
    $region14: #{tpu_custom_call.1} parent=1 // pred_check
      _
    $region15: #{tpu_custom_call.1} parent=1 // pred_check_branch
      %44 = sbr.rel (0) target = $region17
    $region16: #{tpu_custom_call.1} parent=1 // pred_region
      %45 = dma.done [#allocation4], 256
    $region17: #{tpu_custom_call.1} parent=1 // pred_fallthru
      _
    // Predicated region
    $region18: #{tpu_custom_call.1} parent=1 // pred_check
      _
    $region19: #{tpu_custom_call.1} parent=1 // pred_check_branch
      %47 = sbr.rel (0) target = $region21
    $region20: #{tpu_custom_call.1} parent=1 // pred_region
      %48 = dma.done [#allocation7], 64
    $region21: #{tpu_custom_call.1} parent=1 // pred_fallthru
      _
    // Predicated region
    $region22: #{tpu_custom_call.1} parent=1 // pred_check
      _
    $region23: #{tpu_custom_call.1} parent=1 // pred_check_branch
      %50 = sbr.rel (0) target = $region25
    $region24: #{tpu_custom_call.1} parent=1 // pred_region
      %51 = dma.done [#allocation7], 64
    $region25: #{tpu_custom_call.1} parent=1 // pred_fallthru
      _
    %p52 = scmp.eq.s32.totalorder 0, 0
    // Predicated region
    $region26: #{tpu_custom_call.1} parent=1 // pred_check
      %p53 = pneg %p52
    $region27: #{tpu_custom_call.1} parent=1 // pred_check_branch
      %55 = sbr.rel (%p53) target = $region29
    $region28: #{tpu_custom_call.1} parent=1 // pred_region
      %vm56 = vcmask 25600
      %57 = vst.msk [vmem:[#allocation2] sm:$0x3] %vm56, 0.0
    $region29: #{tpu_custom_call.1} parent=1 // pred_fallthru
      _
    %v58 = vld [vmem:[#allocation2] sm:$0x3]
    %v59 = vld [vmem:[#allocation3] sm:$0xff]
    %v60 = vld [vmem:[#allocation3 + $0x8] sm:$0xff]
    %v63 = vcombine.high %v59, %v59
    %v64 = vcombine.high %v60, %v60
    %vm67 = vcmask 1043456
    %v68 = vsel %vm67, %v59, 0.0
    %v69 = vsel %vm67, %v63, 0.0
    %v70 = vadd.f32 %v68, %v69
    %71 = vadd.xlane.f32.xlu0 %v70
    %v72 = vpop.xlane.xlu0 %71
    %v73 = vsel %vm67, %v60, 0.0
    %v74 = vsel %vm67, %v64, 0.0
    %v75 = vadd.f32 %v73, %v74
    %76 = vadd.xlane.f32.xlu0 %v75
    %v77 = vpop.xlane.xlu0 %76
    %v80 = vlaneseq
    %v81 = vand.u32 %v80, 127
    %v82 = vlaneseq
    %v83 = vshrl.u32 %v82, 7
    %v84 = vsub.s32 %v81, %v83
    %v85 = vrot.slane %v72, %v84
    %v86 = vlaneseq
    %v87 = vshrl.u32 %v86, 7
    %v88 = vsub.s32 %v81, %v87
    %v89 = vrot.slane %v77, %v88
    %vm90 = vcmask 1041409
    %v91 = vsel %vm90, %v89, %v85
    %v93 = vadd.f32 %v58, %v91
    %vm94 = vcmask 25600
    %95 = vst.msk [vmem:[#allocation2] sm:$0x3] %vm94, %v93
    // Predicated region
    $region30: #{tpu_custom_call.1} parent=1 // pred_check
      %p96 = pneg %p52
    $region31: #{tpu_custom_call.1} parent=1 // pred_check_branch
      %98 = sbr.rel (%p96) target = $region33
    $region32: #{tpu_custom_call.1} parent=1 // pred_region
      %v99 = vld [vmem:[#allocation2] sm:$0x3]
      %v100 = vmul.f32 %v99, 0.00390625
      %v101 = vld [vmem:[#allocation6] sm:$0xf]
      %vm102 = vcmask 31744
      %v104 = vsel %vm102, %v100, 0
      %v107 = vsel %vm67, %v101, 0
      %109 = vmatprep.subr.mxu0 0.0
      %110 = vmatpush1.msra.mxu0 0.0
      %111 = vmatprep.subr.mxu0 0.0
      %112 = vmatpush1.msra.mxu0 0.0
      %113 = vmatprep.subr.mxu0 0.0
      %114 = vmatpush1.msra.mxu0 0.0
      %115 = vmatprep.subr.mxu0 0.0
      %116 = vmatpush1.msra.mxu0 0.0
      %117 = vmatprep.subr.mxu0 0.0
      %118 = vmatpush1.msra.mxu0 0.0
      %119 = vmatprep.subr.mxu0 0.0
      %120 = vmatpush1.msra.mxu0 0.0
      %121 = vmatprep.subr.mxu0 0.0
      %122 = vmatpush1.msra.mxu0 0.0
      %123 = vmatprep.subr.mxu0 0.0
      %124 = vmatpush1.msra.mxu0 0.0
      %125 = vmatprep.subr.mxu0 0.0
      %126 = vmatpush1.msra.mxu0 0.0
      %127 = vmatprep.subr.mxu0 0.0
      %128 = vmatpush1.msra.mxu0 0.0
      %129 = vmatprep.subr.mxu0 0.0
      %130 = vmatpush1.msra.mxu0 0.0
      %131 = vmatprep.subr.mxu0 0.0
      %132 = vmatpush1.msra.mxu0 0.0
      %133 = vmatprep.subr.mxu0 0.0
      %134 = vmatpush1.msra.mxu0 0.0
      %135 = vmatprep.subr.mxu0 0.0
      %136 = vmatpush1.msra.mxu0 0.0
      %137 = vmatprep.subr.mxu0 0.0
      %138 = vmatpush1.msra.mxu0 0.0
      %139 = vmatprep.subr.mxu0 0.0
      %140 = vmatpush1.msra.mxu0 %v107
      %141 = vmatprep.subr.mxu0 0.0
      %142 = vmatpush2.msra.mxu0 0.0
      %143 = vmatprep.subr.mxu0 0.0
      %144 = vmatpush2.msra.mxu0 0.0
      %145 = vmatprep.subr.mxu0 0.0
      %146 = vmatpush2.msra.mxu0 0.0
      %147 = vmatprep.subr.mxu0 0.0
      %148 = vmatpush2.msra.mxu0 0.0
      %149 = vmatprep.subr.mxu0 0.0
      %150 = vmatpush2.msra.mxu0 0.0
      %151 = vmatprep.subr.mxu0 0.0
      %152 = vmatpush2.msra.mxu0 0.0
      %153 = vmatprep.subr.mxu0 0.0
      %154 = vmatpush2.msra.mxu0 0.0
      %155 = vmatprep.subr.mxu0 0.0
      %156 = vmatpush2.msra.mxu0 0.0
      %157 = vmatprep.subr.mxu0 0.0
      %158 = vmatpush2.msra.mxu0 0.0
      %159 = vmatprep.subr.mxu0 0.0
      %160 = vmatpush2.msra.mxu0 0.0
      %161 = vmatprep.subr.mxu0 0.0
      %162 = vmatpush2.msra.mxu0 0.0
      %163 = vmatprep.subr.mxu0 0.0
      %164 = vmatpush2.msra.mxu0 0.0
      %165 = vmatprep.subr.mxu0 0.0
      %166 = vmatpush2.msra.mxu0 0.0
      %167 = vmatprep.subr.mxu0 0.0
      %168 = vmatpush2.msra.mxu0 0.0
      %169 = vmatprep.subr.mxu0 0.0
      %170 = vmatpush2.msra.mxu0 0.0
      %171 = vmatprep.subr.mxu0 0.0
      %172 = vmatpush2.msra.mxu0 0.0
      %173 = vmatprep.mubr.f32.mxu0 0.0
      %174 = vmatmul.mubr.f32.gmra.mxu0 %v104
      %v175 = vpop.f32.mrf.mxu0
      %v176 = vadd.f32 0.0, %v175
      %v177 = vpop.f32.mrf.mxu0
      %178 = vdwg.mxu0
      %v179 = vmax.f32 %v176, 0.0
      %v180 = vld [vmem:[#allocation8] sm:$0xf]
      %v182 = vsel %vm102, %v179, 0
      %v185 = vsel %vm67, %v180, 0
      %187 = vmatprep.subr.mxu0 0.0
      %188 = vmatpush1.msra.mxu0 0.0
      %189 = vmatprep.subr.mxu0 0.0
      %190 = vmatpush1.msra.mxu0 0.0
      %191 = vmatprep.subr.mxu0 0.0
      %192 = vmatpush1.msra.mxu0 0.0
      %193 = vmatprep.subr.mxu0 0.0
      %194 = vmatpush1.msra.mxu0 0.0
      %195 = vmatprep.subr.mxu0 0.0
      %196 = vmatpush1.msra.mxu0 0.0
      %197 = vmatprep.subr.mxu0 0.0
      %198 = vmatpush1.msra.mxu0 0.0
      %199 = vmatprep.subr.mxu0 0.0
      %200 = vmatpush1.msra.mxu0 0.0
      %201 = vmatprep.subr.mxu0 0.0
      %202 = vmatpush1.msra.mxu0 0.0
      %203 = vmatprep.subr.mxu0 0.0
      %204 = vmatpush1.msra.mxu0 0.0
      %205 = vmatprep.subr.mxu0 0.0
      %206 = vmatpush1.msra.mxu0 0.0
      %207 = vmatprep.subr.mxu0 0.0
      %208 = vmatpush1.msra.mxu0 0.0
      %209 = vmatprep.subr.mxu0 0.0
      %210 = vmatpush1.msra.mxu0 0.0
      %211 = vmatprep.subr.mxu0 0.0
      %212 = vmatpush1.msra.mxu0 0.0
      %213 = vmatprep.subr.mxu0 0.0
      %214 = vmatpush1.msra.mxu0 0.0
      %215 = vmatprep.subr.mxu0 0.0
      %216 = vmatpush1.msra.mxu0 0.0
      %217 = vmatprep.subr.mxu0 0.0
      %218 = vmatpush1.msra.mxu0 %v185
      %219 = vmatprep.subr.mxu0 0.0
      %220 = vmatpush2.msra.mxu0 0.0
      %221 = vmatprep.subr.mxu0 0.0
      %222 = vmatpush2.msra.mxu0 0.0
      %223 = vmatprep.subr.mxu0 0.0
      %224 = vmatpush2.msra.mxu0 0.0
      %225 = vmatprep.subr.mxu0 0.0
      %226 = vmatpush2.msra.mxu0 0.0
      %227 = vmatprep.subr.mxu0 0.0
      %228 = vmatpush2.msra.mxu0 0.0
      %229 = vmatprep.subr.mxu0 0.0
      %230 = vmatpush2.msra.mxu0 0.0
      %231 = vmatprep.subr.mxu0 0.0
      %232 = vmatpush2.msra.mxu0 0.0
      %233 = vmatprep.subr.mxu0 0.0
      %234 = vmatpush2.msra.mxu0 0.0
      %235 = vmatprep.subr.mxu0 0.0
      %236 = vmatpush2.msra.mxu0 0.0
      %237 = vmatprep.subr.mxu0 0.0
      %238 = vmatpush2.msra.mxu0 0.0
      %239 = vmatprep.subr.mxu0 0.0
      %240 = vmatpush2.msra.mxu0 0.0
      %241 = vmatprep.subr.mxu0 0.0
      %242 = vmatpush2.msra.mxu0 0.0
      %243 = vmatprep.subr.mxu0 0.0
      %244 = vmatpush2.msra.mxu0 0.0
      %245 = vmatprep.subr.mxu0 0.0
      %246 = vmatpush2.msra.mxu0 0.0
      %247 = vmatprep.subr.mxu0 0.0
      %248 = vmatpush2.msra.mxu0 0.0
      %249 = vmatprep.subr.mxu0 0.0
      %250 = vmatpush2.msra.mxu0 0.0
      %251 = vmatprep.mubr.f32.mxu0 0.0
      %252 = vmatmul.mubr.f32.gmra.mxu0 %v182
      %v253 = vpop.f32.mrf.mxu0
      %v254 = vadd.f32 0.0, %v253
      %v255 = vpop.f32.mrf.mxu0
      %256 = vdwg.mxu0
      %v257 = vand.u32 2147483647, %v254
      %v258 = vsub.f32 0.0, %v257
      %v259 = vmul.f32 %v258, 1.442695
      %v260 = vpow.pop %v259
      %vm261 = vcmp.ge.f32.partialorder %v254, 0.0
      %v262 = vadd.f32 %v260, 1.0
      %v263 = vrcp.pop %v262
      %v264 = vmul.f32 1.0, %v263
      %v265 = vmul.f32 %v260, %v263
      %v266 = vsel %vm261, %v264, %v265
      %267 = vst.msk [vmem:[#allocation9] sm:$0x3] %vm94, %v266
    $region33: #{tpu_custom_call.1} parent=1 // pred_fallthru
      _
    // Predicated region
    $region34: #{tpu_custom_call.1} parent=1 // pred_check
      _
    $region35: #{tpu_custom_call.1} parent=1 // pred_check_branch
      %269 = sbr.rel (0) target = $region37
    $region36: #{tpu_custom_call.1} parent=1 // pred_region
      %s271 = ssub.s32 32, 32
      %272 = vsyncadd [#allocation5], %s271
      %s274 = sshll.u32 [#allocation9], 4
      %s275 = int_to_ptr.vmem [resolvable:$true] %s274
      %277 = dma.vmem_to_hbm [thread:$0]  %s275, 32, %s3, [#allocation5]
    $region37: #{tpu_custom_call.1} parent=1 // pred_fallthru
      _
    // Predicated region
    $region38: #{tpu_custom_call.1} parent=1 // pred_check
      _
    $region39: #{tpu_custom_call.1} parent=1 // pred_check_branch
      %279 = sbr.rel (0) target = $region41
    $region40: #{tpu_custom_call.1} parent=1 // pred_region
      %280 = dma.done [#allocation5], 32
    $region41: #{tpu_custom_call.1} parent=1 // pred_fallthru
      _
    %281 = vsyncpa [#allocation4], 1
    %282 = vsyncpa [#allocation7], 1
    %283 = vsyncpa [#allocation5], 1

</llo_original>
